<compile_context>
chip_gen: v7x
topology: tpu7x:2x2x1
jax: 0.10.0
libtpu: 0.0.40
codegen_flags: <defaults>
</compile_context>

<pallas_src>
import functools

import jax
import jax.numpy as jnp
from jax.experimental import pallas as pl
from jax.experimental.pallas import tpu as pltpu


def _se_kernel(x_ref, w1t_ref, b1_ref, w2t_ref, b2_ref, o_ref, *, inv_hw):
    x = x_ref[...]                                            # (Bt, C, HWp), input dtype

    # ---- squeeze: global average pool over spatial (fp32 accumulation) ----
    # (zero-padded lanes contribute 0; inv_hw uses the true H*W)
    gap = jnp.sum(x, axis=2, dtype=jnp.float32) * inv_hw      # (Bt, C)

    # ---- excitation MLP, batched over Bt (1x1 convs on 1x1 maps == dense) ----
    h = jnp.dot(gap, w1t_ref[...],
                preferred_element_type=jnp.float32) + b1_ref[...]    # (Bt, mid)
    h = jnp.maximum(h, 0.0)                                           # ReLU
    y = jnp.dot(h, w2t_ref[...],
                preferred_element_type=jnp.float32) + b2_ref[...]     # (Bt, C)
    scale = 1.0 / (1.0 + jnp.exp(-y))                                 # Sigmoid (fp32)

    # ---- excite: broadcast multiply kept in the input dtype ----
    o_ref[...] = (x * scale.astype(x.dtype)[:, :, None]).astype(o_ref.dtype)


def _pick_batch_tile(B, C, HW, itemsize,
                     target_bytes=2 << 20, vmem_budget=24 << 20):
    """Largest divisor of B giving ~target_bytes tiles, >=2 grid steps, VMEM-safe."""
    per_b = max(1, C * HW * itemsize)
    bt = max(1, target_bytes // per_b)
    # 2 buffers x (in + out) double-buffered working set must stay in VMEM.
    bt = min(bt, max(1, vmem_budget // (4 * per_b)))
    # Keep >= 2 grid steps when possible so both v7x TensorCores get work.
    if B >= 2:
        bt = min(bt, B // 2)
    bt = int(min(bt, B))
    while B % bt != 0:
        bt -= 1
    return bt


def se_block(x, w1, b1, w2, b2):
    """SE block forward (matches the PyTorch module).

    x:  (B, C, H, W) NCHW
    w1: (mid, C)  -- Conv2d(C, mid, 1).weight squeezed;  b1: (mid,)
    w2: (C, mid)  -- Conv2d(mid, C, 1).weight squeezed;  b2: (C,)
    """
    B, C, H, W = x.shape
    mid = w1.shape[0]
    HW = H * W

    # Lane-dense output: pad flattened spatial axis up to a multiple of 128
    # (only when needed; demo shapes need no padding).
    HWp = -(-HW // 128) * 128
    x_flat = x.reshape(B, C, HW)
    if HWp != HW:
        x_flat = jnp.pad(x_flat, ((0, 0), (0, 0), (0, HWp - HW)))

    bt = _pick_batch_tile(B, C, HWp, x.dtype.itemsize)
    # TODO(synk): add a two-pass spatially-tiled fallback (GAP pass + scale pass)
    # for v7x when a single (C, HWp) slab with bt=1 cannot fit its 64 MiB VMEM.

    # Pre-transposed weights and row-vector biases -> lane-dense kernel layouts.
    w1t = jnp.asarray(w1).T                                   # (C, mid)
    w2t = jnp.asarray(w2).T                                   # (mid, C)
    b1r = jnp.asarray(b1).reshape(1, mid).astype(jnp.float32)
    b2r = jnp.asarray(b2).reshape(1, C).astype(jnp.float32)

    kernel = functools.partial(_se_kernel, inv_hw=1.0 / float(HW))

    out = pl.pallas_call(
        kernel,
        out_shape=jax.ShapeDtypeStruct((B, C, HWp), x.dtype),
        grid_spec=pltpu.PrefetchScalarGridSpec(
            num_scalar_prefetch=0,
            grid=(B // bt,),
            in_specs=[
                pl.BlockSpec((bt, C, HWp), lambda b: (b, 0, 0)),
                pl.BlockSpec((C, mid), lambda b: (0, 0)),
                pl.BlockSpec((1, mid), lambda b: (0, 0)),
                pl.BlockSpec((mid, C), lambda b: (0, 0)),
                pl.BlockSpec((1, C), lambda b: (0, 0)),
            ],
            out_specs=pl.BlockSpec((bt, C, HWp), lambda b: (b, 0, 0)),
        ),
        compiler_params=pltpu.CompilerParams(
            dimension_semantics=("parallel",)),
    )(x_flat, w1t, b1r, w2t, b2r)

    if HWp != HW:
        out = out[:, :, :HW]
    return out.reshape(B, C, H, W)


def se_block_ref(x, w1, b1, w2, b2):
    """Pure-JAX reference matching the PyTorch forward."""
    xf = x.astype(jnp.float32)
    gap = jnp.mean(xf, axis=(2, 3))                           # (B, C)
    h = jnp.maximum(gap @ w1.T + b1, 0.0)                     # (B, mid)
    y = jax.nn.sigmoid(h @ w2.T + b2)                         # (B, C)
    return (xf * y[:, :, None, None]).astype(x.dtype)


if __name__ == "__main__":
    # Small shapes consistent with the module (ratio=16 => C >= 16).
    B, C, H, W = 4, 32, 16, 16
    ratio = 16
    mid = C // ratio

    key = jax.random.PRNGKey(0)
    kx, k1, k2, k3, k4 = jax.random.split(key, 5)

    x = jax.random.normal(kx, (B, C, H, W), dtype=jnp.float32)
    # Conv2d(C, mid, 1): weight (mid, C, 1, 1) -> (mid, C); bias (mid,)
    w1 = jax.random.normal(k1, (mid, C), dtype=jnp.float32) * 0.1
    b1 = jax.random.normal(k2, (mid,), dtype=jnp.float32) * 0.1
    # Conv2d(mid, C, 1): weight (C, mid, 1, 1) -> (C, mid); bias (C,)
    w2 = jax.random.normal(k3, (C, mid), dtype=jnp.float32) * 0.1
    b2 = jax.random.normal(k4, (C,), dtype=jnp.float32) * 0.1

    out = se_block(x, w1, b1, w2, b2)
    jax.block_until_ready(out)

    ref = se_block_ref(x, w1, b1, w2, b2)
    assert out.shape == (B, C, H, W)
    assert jnp.allclose(out, ref, atol=1e-5, rtol=1e-5), "mismatch vs reference"

    print("KERNEL_OK")
</pallas_src>

<mosaic_0001>
module attributes {stable_mosaic.version = 11 : i64} {
  func.func @_se_kernel(%arg0: i32, %arg1: memref<2x32x256xf32, #tpu.memory_space<vmem>>, %arg2: memref<32x2xf32, #tpu.memory_space<vmem>>, %arg3: memref<1x2xf32, #tpu.memory_space<vmem>>, %arg4: memref<2x32xf32, #tpu.memory_space<vmem>>, %arg5: memref<1x32xf32, #tpu.memory_space<vmem>>, %arg6: memref<2x32x256xf32, #tpu.memory_space<vmem>>) attributes {dimension_semantics = [#tpu.dimension_semantics<parallel>], iteration_bounds = array<i64: 2>, scalar_prefetch = 0 : i64, scratch_operands = 0 : i64, tpu.core_type = #tpu.core_type<tc>, window_params = [{transform_indices = @transform_0, window_bounds = array<i64: 2, 32, 256>}, {pipeline_mode = #tpu.pipeline_mode<synchronous>, transform_indices = @transform_1, window_bounds = array<i64: 32, 2>}, {pipeline_mode = #tpu.pipeline_mode<synchronous>, transform_indices = @transform_2, window_bounds = array<i64: 1, 2>}, {pipeline_mode = #tpu.pipeline_mode<synchronous>, transform_indices = @transform_3, window_bounds = array<i64: 2, 32>}, {pipeline_mode = #tpu.pipeline_mode<synchronous>, transform_indices = @transform_4, window_bounds = array<i64: 1, 32>}, {transform_indices = @transform_5, window_bounds = array<i64: 2, 32, 256>}]} {
    %c0 = arith.constant 0 : index
    %c0_0 = arith.constant 0 : index
    %c0_1 = arith.constant 0 : index
    %0 = vector.load %arg1[%c0, %c0_0, %c0_1] : memref<2x32x256xf32, #tpu.memory_space<vmem>>, vector<2x32x256xf32>
    %cst = arith.constant dense<0.000000e+00> : vector<2x32xf32>
    %1 = vector.multi_reduction <add>, %0, %cst [2] : vector<2x32x256xf32> to vector<2x32xf32>
    %cst_2 = arith.constant 3.906250e-03 : f32
    %2 = vector.broadcast %cst_2 : f32 to vector<2x32xf32>
    %3 = arith.mulf %1, %2 : vector<2x32xf32>
    %c0_3 = arith.constant 0 : index
    %c0_4 = arith.constant 0 : index
    %4 = vector.load %arg2[%c0_3, %c0_4] : memref<32x2xf32, #tpu.memory_space<vmem>>, vector<32x2xf32>
    %cst_5 = arith.constant dense<0.000000e+00> : vector<2x2xf32>
    %5 = tpu.matmul %3, %4, %cst_5 {dimension_numbers = #tpu.dot_dimension_numbers<[1], [0], [0], [1], [0, 0, 1, 1], [], []>} : vector<2x32xf32>, vector<32x2xf32>, vector<2x2xf32> -> vector<2x2xf32>
    %c0_6 = arith.constant 0 : index
    %c0_7 = arith.constant 0 : index
    %6 = vector.load %arg3[%c0_6, %c0_7] : memref<1x2xf32, #tpu.memory_space<vmem>>, vector<1x2xf32>
    %7 = vector.broadcast %6 : vector<1x2xf32> to vector<2x2xf32>
    %8 = arith.addf %5, %7 : vector<2x2xf32>
    %cst_8 = arith.constant 0.000000e+00 : f32
    %9 = vector.broadcast %cst_8 : f32 to vector<2x2xf32>
    %10 = arith.maximumf %8, %9 : vector<2x2xf32>
    %c0_9 = arith.constant 0 : index
    %c0_10 = arith.constant 0 : index
    %11 = vector.load %arg4[%c0_9, %c0_10] : memref<2x32xf32, #tpu.memory_space<vmem>>, vector<2x32xf32>
    %cst_11 = arith.constant dense<0.000000e+00> : vector<2x32xf32>
    %12 = tpu.matmul %10, %11, %cst_11 {dimension_numbers = #tpu.dot_dimension_numbers<[1], [0], [0], [1], [0, 0, 1, 1], [], []>} : vector<2x2xf32>, vector<2x32xf32>, vector<2x32xf32> -> vector<2x32xf32>
    %c0_12 = arith.constant 0 : index
    %c0_13 = arith.constant 0 : index
    %13 = vector.load %arg5[%c0_12, %c0_13] : memref<1x32xf32, #tpu.memory_space<vmem>>, vector<1x32xf32>
    %14 = vector.broadcast %13 : vector<1x32xf32> to vector<2x32xf32>
    %15 = arith.addf %12, %14 : vector<2x32xf32>
    %cst_14 = arith.constant 0.000000e+00 : f32
    %16 = vector.broadcast %cst_14 : f32 to vector<2x32xf32>
    %17 = arith.subf %16, %15 : vector<2x32xf32>
    %18 = math.exp %17 : vector<2x32xf32>
    %cst_15 = arith.constant 1.000000e+00 : f32
    %19 = vector.broadcast %cst_15 : f32 to vector<2x32xf32>
    %20 = arith.addf %19, %18 : vector<2x32xf32>
    %cst_16 = arith.constant 1.000000e+00 : f32
    %21 = vector.broadcast %cst_16 : f32 to vector<2x32xf32>
    %22 = arith.divf %21, %20 : vector<2x32xf32>
    %23 = vector.shape_cast %22 : vector<2x32xf32> to vector<2x32x1xf32>
    %24 = vector.broadcast %23 : vector<2x32x1xf32> to vector<2x32x256xf32>
    %25 = arith.mulf %0, %24 : vector<2x32x256xf32>
    %c0_17 = arith.constant 0 : index
    %c0_18 = arith.constant 0 : index
    %c0_19 = arith.constant 0 : index
    %26 = vector.load %arg6[%c0_17, %c0_18, %c0_19] : memref<2x32x256xf32, #tpu.memory_space<vmem>>, vector<2x32x256xf32>
    tpu.vector_store %arg6[%c0_17, %c0_18, %c0_19], %25 {strides = array<i32>} : memref<2x32x256xf32, #tpu.memory_space<vmem>>, vector<2x32x256xf32>,
    return
  }
  func.func @transform_0(%arg0: i32) -> (i32, i32, i32) {
    %c0_i32 = arith.constant 0 : i32
    %c0_i32_0 = arith.constant 0 : i32
    %c0_i32_1 = arith.constant 0 : i32
    return %arg0, %c0_i32, %c0_i32_0 : i32, i32, i32
  }
  func.func @transform_1(%arg0: i32) -> (i32, i32) {
    %c0_i32 = arith.constant 0 : i32
    %c0_i32_0 = arith.constant 0 : i32
    %c0_i32_1 = arith.constant 0 : i32
    return %c0_i32, %c0_i32_0 : i32, i32
  }
  func.func @transform_2(%arg0: i32) -> (i32, i32) {
    %c0_i32 = arith.constant 0 : i32
    %c0_i32_0 = arith.constant 0 : i32
    %c0_i32_1 = arith.constant 0 : i32
    return %c0_i32, %c0_i32_0 : i32, i32
  }
  func.func @transform_3(%arg0: i32) -> (i32, i32) {
    %c0_i32 = arith.constant 0 : i32
    %c0_i32_0 = arith.constant 0 : i32
    %c0_i32_1 = arith.constant 0 : i32
    return %c0_i32, %c0_i32_0 : i32, i32
  }
  func.func @transform_4(%arg0: i32) -> (i32, i32) {
    %c0_i32 = arith.constant 0 : i32
    %c0_i32_0 = arith.constant 0 : i32
    %c0_i32_1 = arith.constant 0 : i32
    return %c0_i32, %c0_i32_0 : i32, i32
  }
  func.func @transform_5(%arg0: i32) -> (i32, i32, i32) {
    %c0_i32 = arith.constant 0 : i32
    %c0_i32_0 = arith.constant 0 : i32
    %c0_i32_1 = arith.constant 0 : i32
    return %arg0, %c0_i32, %c0_i32_0 : i32, i32, i32
  }
}

</mosaic_0001>

<llo_original>
// kernel: tpu_custom_call.1
$region0: #{tpu_custom_call.1}
  #allocation0 [shape = 'u32[]', space=smem, size = 0x4, offset = 0x4, fixed_abs, tag = 'smem constant byte address 0x4 - core index']
  #allocation1 [shape = 'u32[144,128]{1,0:T(1,128)}', space=vmem, size = 0x12000, scoped, tag = 'internal scratch']
  %s0 = inlined_call_operand.hbm [shape: f32[4,32,256], index: 0, kind: input, shape index: {}]
  %s1 = inlined_call_operand.vmem [shape: f32[32,2], index: 1, kind: input, shape index: {}]
  %s2 = inlined_call_operand.vmem [shape: f32[1,2], index: 2, kind: input, shape index: {}]
  %s3 = inlined_call_operand.vmem [shape: f32[2,32], index: 3, kind: input, shape index: {}]
  %s4 = inlined_call_operand.vmem [shape: f32[1,32], index: 4, kind: input, shape index: {}]
  %s5 = inlined_call_operand.hbm [shape: f32[4,32,256], index: 5, kind: output, shape index: {}]
  %s6 = sld [smem:[#allocation0]]
  $region57: #{tpu_custom_call.1} parent=0
    _
  %s8 = ssub.s32 1, %s6
  %s9 = scalar_select 0, %s8, %s6
  $region1: #{tpu_custom_call.1} parent=0
    #allocation2 [shape = 'u8[131072]{0}', space=vmem, size = 0x20000, scoped, tag = 'input window, operand 0']
    #allocation3 [shape = 's32[2]{0}', space=sflag, size = 0x8, scoped, tag = 'scoped memory for tpu_custom_call.1']
    #allocation4 [shape = 's32[2]{0}', space=sflag, size = 0x8, scoped, tag = 'scoped memory for tpu_custom_call.1']
    #allocation5 [shape = 'u8[131072]{0}', space=vmem, size = 0x20000, scoped, tag = 'output window, operand 0']
    %10 = vsyncpa [#allocation3], 0
    %s11 = scalar_lea.sflag [#allocation3], 1
    %12 = vsyncpa %s11, 0
    %13 = vsyncpa [#allocation4], 0
    %s14 = scalar_lea.sflag [#allocation4], 1
    %15 = vsyncpa %s14, 0
    loop: start=0, step=1, limit=4
    $region2: #{tpu_custom_call.1} parent=1 // loop_pre_header
      _
    $region3: #{tpu_custom_call.1} parent=1 // loop_header
      %s17 = sphi 0, %s21
      %p18 = scmp.ge.s32.totalorder %s17, 4
      %s27 = sphi 0, %s29
      %s30 = sphi 0, %s27
      %s31 = sphi 0, %s30
      %s47 = sphi 0, %s31
      %s51 = sphi 0, %s51
      %s53 = sphi 0, %s51
      %s54 = sphi 0, %s53
      %s68 = sphi 0, %s54
      %s72 = sphi 0, %s72
      %s74 = sphi 0, %s72
      %s75 = sphi 0, %s74
      %s89 = sphi 0, %s75
      %s93 = sphi 0, %s93
      %s95 = sphi 0, %s93
      %s96 = sphi 0, %s95
      %s110 = sphi 0, %s96
      %s114 = sphi 0, %s114
      %s116 = sphi 0, %s114
      %s117 = sphi 0, %s116
      %s131 = sphi 0, %s117
      %s137 = sphi 0, %s139
      %s140 = sphi 0, %s137
      %s141 = sphi 0, %s140
      %s157 = sphi 0, %s141
    $region4: #{tpu_custom_call.1} parent=1 // loop_header_branch
      %20 = sbr.rel (%p18) target = $region8
    $region5: #{tpu_custom_call.1} parent=1 // loop_body
      %s22 = ssub.s32 %s17, 1
      %s23 = ssub.s32 %s17, 2
      %s24 = sadd.s32 %s17, 1
      %s25 = ssub.s32 %s17, %s24
      %p26 = scmp.eq.s32.totalorder %s25, 0
      %s28 = sadd.s32 %s27, 1
      %s29 = scalar_select %p26, %s27, %s28
      %p32 = pneg %p26
      %p33 = scmp.eq.s32.totalorder %s17, 1
      %p34 = por %p32, %p33
      %p35 = scmp.ne.s32.totalorder %s27, %s30
      %p36 = scmp.eq.s32.totalorder %s17, 0
      %p37 = por %p35, %p36
      %p38 = scmp.ne.s32.totalorder %s27, %s30
      %p39 = scmp.eq.s32.totalorder %s22, 1
      %p40 = por %p38, %p39
      %p41 = scmp.ne.s32.totalorder %s30, %s31
      %p42 = scmp.eq.s32.totalorder %s22, 0
      %p43 = por %p41, %p42
      %p44 = scmp.ne.s32.totalorder %s30, %s31
      %p45 = scmp.eq.s32.totalorder %s23, 1
      %p46 = por %p44, %p45
      %p48 = scmp.ne.s32.totalorder %s31, %s47
      %p49 = scmp.eq.s32.totalorder %s23, 0
      %p50 = por %p48, %p49
      %s52 = sadd.s32 %s51, 1
      %p55 = scmp.eq.s32.totalorder %s17, 1
      %p56 = scmp.ne.s32.totalorder %s51, %s53
      %p57 = scmp.eq.s32.totalorder %s17, 0
      %p58 = por %p56, %p57
      %p59 = scmp.ne.s32.totalorder %s51, %s53
      %p60 = scmp.eq.s32.totalorder %s22, 1
      %p61 = por %p59, %p60
      %p62 = scmp.ne.s32.totalorder %s53, %s54
      %p63 = scmp.eq.s32.totalorder %s22, 0
      %p64 = por %p62, %p63
      %p65 = scmp.ne.s32.totalorder %s53, %s54
      %p66 = scmp.eq.s32.totalorder %s23, 1
      %p67 = por %p65, %p66
      %p69 = scmp.ne.s32.totalorder %s54, %s68
      %p70 = scmp.eq.s32.totalorder %s23, 0
      %p71 = por %p69, %p70
      %s73 = sadd.s32 %s72, 1
      %p76 = scmp.eq.s32.totalorder %s17, 1
      %p77 = scmp.ne.s32.totalorder %s72, %s74
      %p78 = scmp.eq.s32.totalorder %s17, 0
      %p79 = por %p77, %p78
      %p80 = scmp.ne.s32.totalorder %s72, %s74
      %p81 = scmp.eq.s32.totalorder %s22, 1
      %p82 = por %p80, %p81
      %p83 = scmp.ne.s32.totalorder %s74, %s75
      %p84 = scmp.eq.s32.totalorder %s22, 0
      %p85 = por %p83, %p84
      %p86 = scmp.ne.s32.totalorder %s74, %s75
      %p87 = scmp.eq.s32.totalorder %s23, 1
      %p88 = por %p86, %p87
      %p90 = scmp.ne.s32.totalorder %s75, %s89
      %p91 = scmp.eq.s32.totalorder %s23, 0
      %p92 = por %p90, %p91
      %s94 = sadd.s32 %s93, 1
      %p97 = scmp.eq.s32.totalorder %s17, 1
      %p98 = scmp.ne.s32.totalorder %s93, %s95
      %p99 = scmp.eq.s32.totalorder %s17, 0
      %p100 = por %p98, %p99
      %p101 = scmp.ne.s32.totalorder %s93, %s95
      %p102 = scmp.eq.s32.totalorder %s22, 1
      %p103 = por %p101, %p102
      %p104 = scmp.ne.s32.totalorder %s95, %s96
      %p105 = scmp.eq.s32.totalorder %s22, 0
      %p106 = por %p104, %p105
      %p107 = scmp.ne.s32.totalorder %s95, %s96
      %p108 = scmp.eq.s32.totalorder %s23, 1
      %p109 = por %p107, %p108
      %p111 = scmp.ne.s32.totalorder %s96, %s110
      %p112 = scmp.eq.s32.totalorder %s23, 0
      %p113 = por %p111, %p112
      %s115 = sadd.s32 %s114, 1
      %p118 = scmp.eq.s32.totalorder %s17, 1
      %p119 = scmp.ne.s32.totalorder %s114, %s116
      %p120 = scmp.eq.s32.totalorder %s17, 0
      %p121 = por %p119, %p120
      %p122 = scmp.ne.s32.totalorder %s114, %s116
      %p123 = scmp.eq.s32.totalorder %s22, 1
      %p124 = por %p122, %p123
      %p125 = scmp.ne.s32.totalorder %s116, %s117
      %p126 = scmp.eq.s32.totalorder %s22, 0
      %p127 = por %p125, %p126
      %p128 = scmp.ne.s32.totalorder %s116, %s117
      %p129 = scmp.eq.s32.totalorder %s23, 1
      %p130 = por %p128, %p129
      %p132 = scmp.ne.s32.totalorder %s117, %s131
      %p133 = scmp.eq.s32.totalorder %s23, 0
      %p134 = por %p132, %p133
      %s135 = ssub.s32 %s17, %s24
      %p136 = scmp.eq.s32.totalorder %s135, 0
      %s138 = sadd.s32 %s137, 1
      %s139 = scalar_select %p136, %s137, %s138
      %p142 = pneg %p136
      %p143 = scmp.eq.s32.totalorder %s17, 1
      %p144 = por %p142, %p143
      %p145 = scmp.ne.s32.totalorder %s137, %s140
      %p146 = scmp.eq.s32.totalorder %s17, 0
      %p147 = por %p145, %p146
      %p148 = scmp.ne.s32.totalorder %s137, %s140
      %p149 = scmp.eq.s32.totalorder %s22, 1
      %p150 = por %p148, %p149
      %p151 = scmp.ne.s32.totalorder %s140, %s141
      %p152 = scmp.eq.s32.totalorder %s22, 0
      %p153 = por %p151, %p152
      %p154 = scmp.ne.s32.totalorder %s140, %s141
      %p155 = scmp.eq.s32.totalorder %s23, 1
      %p156 = por %p154, %p155
      %p158 = scmp.ne.s32.totalorder %s141, %s157
      %p159 = scmp.eq.s32.totalorder %s23, 0
      %p160 = por %p158, %p159
      %p161 = scmp.le.s32.totalorder 1, %s17
      %p162 = scmp.lt.s32.totalorder %s17, 3
      %p163 = pnand %p161, %p162
      %p164 = pneg %p163
      // Predicated region
      $region9: #{tpu_custom_call.1} parent=5 // pred_check
        _
      $region10: #{tpu_custom_call.1} parent=5 // pred_check_branch
        %166 = sbr.rel (%p163) target = $region12
      $region11: #{tpu_custom_call.1} parent=5 // pred_region
        %s167 = ssub.s32 %s17, 1
        // Predicated region
        $region13: #{tpu_custom_call.1} parent=11 // pred_check
          %p168 = pneg %p64
        $region14: #{tpu_custom_call.1} parent=11 // pred_check_branch
          %170 = sbr.rel (%p168) target = $region16
        $region15: #{tpu_custom_call.1} parent=11 // pred_region
          _
        $region16: #{tpu_custom_call.1} parent=11 // pred_fallthru
          _
        // Predicated region
        $region17: #{tpu_custom_call.1} parent=11 // pred_check
          %p171 = pneg %p85
        $region18: #{tpu_custom_call.1} parent=11 // pred_check_branch
          %173 = sbr.rel (%p171) target = $region20
        $region19: #{tpu_custom_call.1} parent=11 // pred_region
          _
        $region20: #{tpu_custom_call.1} parent=11 // pred_fallthru
          _
        // Predicated region
        $region21: #{tpu_custom_call.1} parent=11 // pred_check
          %p174 = pneg %p106
        $region22: #{tpu_custom_call.1} parent=11 // pred_check_branch
          %176 = sbr.rel (%p174) target = $region24
        $region23: #{tpu_custom_call.1} parent=11 // pred_region
          _
        $region24: #{tpu_custom_call.1} parent=11 // pred_fallthru
          _
        // Predicated region
        $region25: #{tpu_custom_call.1} parent=11 // pred_check
          %p177 = pneg %p127
        $region26: #{tpu_custom_call.1} parent=11 // pred_check_branch
          %179 = sbr.rel (%p177) target = $region28
        $region27: #{tpu_custom_call.1} parent=11 // pred_region
          _
        $region28: #{tpu_custom_call.1} parent=11 // pred_fallthru
          _
      $region12: #{tpu_custom_call.1} parent=5 // pred_fallthru
        _
      %p180 = scmp.lt.s32.totalorder %s17, 2
      // Predicated region
      $region29: #{tpu_custom_call.1} parent=5 // pred_check
        %p181 = pneg %p180
      $region30: #{tpu_custom_call.1} parent=5 // pred_check_branch
        %183 = sbr.rel (%p181) target = $region32
      $region31: #{tpu_custom_call.1} parent=5 // pred_region
        // Predicated region
        $region33: #{tpu_custom_call.1} parent=31 // pred_check
          %p184 = pneg %p37
        $region34: #{tpu_custom_call.1} parent=31 // pred_check_branch
          %186 = sbr.rel (%p184) target = $region36
        $region35: #{tpu_custom_call.1} parent=31 // pred_region
          %s187 = sand.u32 %s27, 1
          %s188 = scalar_lea.sflag [#allocation3], %s187
          %s189 = sand.u32 %s27, 1
          %s190 = smul.addr %s189, 128
          %s191 = scalar_lea.vmem [#allocation2], %s190
          %s192 = smul.u32 2, %s17
          %s194 = ssub.s32 2048, 2048
          %195 = vsyncadd %s188, %s194
          %s196 = smul.addr %s192, 8
          %s197 = smul.addr %s196, 128
          %s198 = scalar_lea.hbm %s0, %s197
          %s199 = sshll.u32 %s191, 4
          %s200 = int_to_ptr.vmem [resolvable:$true] %s199
          %205 = dma.hbm_to_vmem [thread:$0]  %s198, 2048, %s200, %s188, 256, 256, 16
        $region36: #{tpu_custom_call.1} parent=31 // pred_fallthru
          _
      $region32: #{tpu_custom_call.1} parent=5 // pred_fallthru
        _
      %p206 = scmp.le.s32.totalorder 1, %s17
      %p207 = scmp.lt.s32.totalorder %s17, 3
      %p208 = pnand %p206, %p207
      %p209 = pneg %p208
      // Predicated region
      $region37: #{tpu_custom_call.1} parent=5 // pred_check
        _
      $region38: #{tpu_custom_call.1} parent=5 // pred_check_branch
        %211 = sbr.rel (%p208) target = $region40
      $region39: #{tpu_custom_call.1} parent=5 // pred_region
        %s212 = ssub.s32 %s17, 1
        %s213 = sand.u32 %s30, 1
        %s214 = scalar_lea.sflag [#allocation3], %s213
        %s215 = sand.u32 %s30, 1
        %s216 = smul.addr %s215, 128
        %s217 = scalar_lea.vmem [#allocation2], %s216
        // Predicated region
        $region41: #{tpu_custom_call.1} parent=39 // pred_check
          %p218 = pneg %p43
        $region42: #{tpu_custom_call.1} parent=39 // pred_check_branch
          %220 = sbr.rel (%p218) target = $region44
        $region43: #{tpu_custom_call.1} parent=39 // pred_region
          %221 = dma.done %s214, 2048
        $region44: #{tpu_custom_call.1} parent=39 // pred_fallthru
          _
        %s222 = sand.u32 %s30, 1
        %s223 = scalar_lea.sflag [#allocation3], %s222
        %s224 = sand.u32 %s30, 1
        %s225 = smul.addr %s224, 128
        %s226 = scalar_lea.vmem [#allocation2], %s225
        %p227 = pneg %p43
        %p228 = pneg %p40
        %p229 = pneg %p64
        %p230 = pneg %p61
        %p231 = pneg %p85
        %p232 = pneg %p82
        %p233 = pneg %p106
        %p234 = pneg %p103
        %p235 = pneg %p127
        %p236 = pneg %p124
        %p237 = pneg %p153
        %p238 = pneg %p150
        %s239 = sand.u32 %s140, 1
        %s240 = scalar_lea.sflag [#allocation4], %s239
        %s241 = sand.u32 %s140, 1
        %s242 = smul.addr %s241, 128
        %s243 = scalar_lea.vmem [#allocation5], %s242
        %s244 = smul.u32 2, %s22
        %s245 = smul.u32 2, %s22
        %v246 = vld [vmem:[%s217] sm:$0xff]
        %v247 = vld [vmem:[%s217 + $0x8] sm:$0xff]
        %v248 = vld [vmem:[%s217 + $0x10] sm:$0xff]
        %v249 = vld [vmem:[%s217 + $0x18] sm:$0xff]
        %v250 = vld [vmem:[%s217 + $0x20] sm:$0xff]
        %v251 = vld [vmem:[%s217 + $0x28] sm:$0xff]
        %v252 = vld [vmem:[%s217 + $0x30] sm:$0xff]
        %v253 = vld [vmem:[%s217 + $0x38] sm:$0xff]
        %v254 = vld [vmem:[%s217 + $0x40] sm:$0xff]
        %v255 = vld [vmem:[%s217 + $0x48] sm:$0xff]
        %v256 = vld [vmem:[%s217 + $0x50] sm:$0xff]
        %v257 = vld [vmem:[%s217 + $0x58] sm:$0xff]
        %v258 = vld [vmem:[%s217 + $0x60] sm:$0xff]
        %v259 = vld [vmem:[%s217 + $0x68] sm:$0xff]
        %v260 = vld [vmem:[%s217 + $0x70] sm:$0xff]
        %v261 = vld [vmem:[%s217 + $0x78] sm:$0xff]
        %v262 = vadd.f32 %v246, %v247
        %263 = vadd.xlane.f32.xlu0 %v262
        %v264 = vpop.xlane.xlu0 %263
        %v265 = vadd.f32 %v248, %v249
        %266 = vadd.xlane.f32.xlu0 %v265
        %v267 = vpop.xlane.xlu0 %266
        %v268 = vadd.f32 %v250, %v251
        %269 = vadd.xlane.f32.xlu0 %v268
        %v270 = vpop.xlane.xlu0 %269
        %v271 = vadd.f32 %v252, %v253
        %272 = vadd.xlane.f32.xlu0 %v271
        %v273 = vpop.xlane.xlu0 %272
        %v274 = vadd.f32 %v254, %v255
        %275 = vadd.xlane.f32.xlu0 %v274
        %v276 = vpop.xlane.xlu0 %275
        %v277 = vadd.f32 %v256, %v257
        %278 = vadd.xlane.f32.xlu0 %v277
        %v279 = vpop.xlane.xlu0 %278
        %v280 = vadd.f32 %v258, %v259
        %281 = vadd.xlane.f32.xlu0 %v280
        %v282 = vpop.xlane.xlu0 %281
        %v283 = vadd.f32 %v260, %v261
        %284 = vadd.xlane.f32.xlu0 %v283
        %v285 = vpop.xlane.xlu0 %284
        %v286 = vmul.f32 %v264, 0.00390625
        %v287 = vmul.f32 %v267, 0.00390625
        %v288 = vmul.f32 %v270, 0.00390625
        %v289 = vmul.f32 %v273, 0.00390625
        %v290 = vmul.f32 %v276, 0.00390625
        %v291 = vmul.f32 %v279, 0.00390625
        %v292 = vmul.f32 %v282, 0.00390625
        %v293 = vmul.f32 %v285, 0.00390625
        %v294 = vld [vmem:[%s1] sm:$0xff]
        %v295 = vld [vmem:[%s1 + $0x8] sm:$0xff]
        %v296 = vld [vmem:[%s1 + $0x10] sm:$0xff]
        %v297 = vld [vmem:[%s1 + $0x18] sm:$0xff]
        %v298 = vld [vmem:[%s2] sm:$0x1]
        %v300 = vlaneseq
        %v301 = vshrl.u32 %v300, 7
        %v302 = vsub.s32 0, %v301
        %v303 = vrot.slane %v298, %v302
        %v313 = vlaneseq
        %v314 = vand.u32 %v313, 127
        %v315 = vlaneseq
        %v316 = vshrl.u32 %v315, 7
        %v317 = vsub.s32 %v314, %v316
        %v318 = vrot.slane %v286, %v317
        %v319 = vadd.s32 %v314, 4294967288
        %v320 = vlaneseq
        %v321 = vshrl.u32 %v320, 7
        %v322 = vsub.s32 %v319, %v321
        %v323 = vrot.slane %v287, %v322
        %vm324 = vcmask 130112
        %v325 = vsel %vm324, %v323, %v318
        %v326 = vadd.s32 %v314, 4294967280
        %v327 = vlaneseq
        %v328 = vshrl.u32 %v327, 7
        %v329 = vsub.s32 %v326, %v328
        %v330 = vrot.slane %v288, %v329
        %vm331 = vcmask 195712
        %v332 = vsel %vm331, %v330, %v325
        %v333 = vadd.s32 %v314, 4294967272
        %v334 = vlaneseq
        %v335 = vshrl.u32 %v334, 7
        %v336 = vsub.s32 %v333, %v335
        %v337 = vrot.slane %v289, %v336
        %vm338 = vcmask 261312
        %v339 = vsel %vm338, %v337, %v332
        %v340 = vlaneseq
        %v341 = vshrl.u32 %v340, 7
        %v342 = vsub.s32 %v314, %v341
        %v343 = vrot.slane %v290, %v342
        %v344 = vlaneseq
        %v345 = vshrl.u32 %v344, 7
        %v346 = vsub.s32 %v319, %v345
        %v347 = vrot.slane %v291, %v346
        %v348 = vsel %vm324, %v347, %v343
        %v349 = vlaneseq
        %v350 = vshrl.u32 %v349, 7
        %v351 = vsub.s32 %v326, %v350
        %v352 = vrot.slane %v292, %v351
        %v353 = vsel %vm331, %v352, %v348
        %v354 = vlaneseq
        %v355 = vshrl.u32 %v354, 7
        %v356 = vsub.s32 %v333, %v355
        %v357 = vrot.slane %v293, %v356
        %v358 = vsel %vm338, %v357, %v353
        %vm359 = vcmask 1041409
        %v360 = vsel %vm359, %v358, %v339
        %vm361 = vcmask 261120
        %v362 = vsel %vm361, %v360, 0
        %364 = vmatprep.subr.mxu0 0.0
        %365 = vmatpush1.msra.mxu0 %v294
        %366 = vmatprep.subr.mxu0 0.0
        %367 = vmatpush1.msra.mxu0 %v295
        %368 = vmatprep.subr.mxu0 0.0
        %369 = vmatpush1.msra.mxu0 %v296
        %370 = vmatprep.subr.mxu0 0.0
        %371 = vmatpush1.msra.mxu0 %v297
        %372 = vmatprep.subr.mxu0 0.0
        %373 = vmatpush1.msra.mxu0 0.0
        %374 = vmatprep.subr.mxu0 0.0
        %375 = vmatpush1.msra.mxu0 0.0
        %376 = vmatprep.subr.mxu0 0.0
        %377 = vmatpush1.msra.mxu0 0.0
        %378 = vmatprep.subr.mxu0 0.0
        %379 = vmatpush1.msra.mxu0 0.0
        %380 = vmatprep.subr.mxu0 0.0
        %381 = vmatpush1.msra.mxu0 0.0
        %382 = vmatprep.subr.mxu0 0.0
        %383 = vmatpush1.msra.mxu0 0.0
        %384 = vmatprep.subr.mxu0 0.0
        %385 = vmatpush1.msra.mxu0 0.0
        %386 = vmatprep.subr.mxu0 0.0
        %387 = vmatpush1.msra.mxu0 0.0
        %388 = vmatprep.subr.mxu0 0.0
        %389 = vmatpush1.msra.mxu0 0.0
        %390 = vmatprep.subr.mxu0 0.0
        %391 = vmatpush1.msra.mxu0 0.0
        %392 = vmatprep.subr.mxu0 0.0
        %393 = vmatpush1.msra.mxu0 0.0
        %394 = vmatprep.subr.mxu0 0.0
        %395 = vmatpush1.msra.mxu0 0.0
        %396 = vmatprep.subr.mxu0 0.0
        %397 = vmatpush1.msra.mxu0 0.0
        %398 = vmatprep.subr.mxu0 0.0
        %399 = vmatpush1.msra.mxu0 0.0
        %400 = vmatprep.subr.mxu0 0.0
        %401 = vmatpush1.msra.mxu0 0.0
        %402 = vmatprep.subr.mxu0 0.0
        %403 = vmatpush1.msra.mxu0 0.0
        %404 = vmatprep.subr.mxu0 0.0
        %405 = vmatpush1.msra.mxu0 0.0
        %406 = vmatprep.subr.mxu0 0.0
        %407 = vmatpush1.msra.mxu0 0.0
        %408 = vmatprep.subr.mxu0 0.0
        %409 = vmatpush1.msra.mxu0 0.0
        %410 = vmatprep.subr.mxu0 0.0
        %411 = vmatpush1.msra.mxu0 0.0
        %412 = vmatprep.subr.mxu0 0.0
        %413 = vmatpush1.msra.mxu0 0.0
        %414 = vmatprep.subr.mxu0 0.0
        %415 = vmatpush1.msra.mxu0 0.0
        %416 = vmatprep.subr.mxu0 0.0
        %417 = vmatpush1.msra.mxu0 0.0
        %418 = vmatprep.subr.mxu0 0.0
        %419 = vmatpush1.msra.mxu0 0.0
        %420 = vmatprep.subr.mxu0 0.0
        %421 = vmatpush1.msra.mxu0 0.0
        %422 = vmatprep.subr.mxu0 0.0
        %423 = vmatpush1.msra.mxu0 0.0
        %424 = vmatprep.subr.mxu0 0.0
        %425 = vmatpush1.msra.mxu0 0.0
        %426 = vmatprep.subr.mxu0 0.0
        %427 = vmatpush1.msra.mxu0 0.0
        %428 = vmatprep.mubr.f32.mxu0 0.0
        %429 = vmatmul.mubr.f32.gmra.mrb[0].mxu0 %v362
        %v430 = vpop.f32.mrb[0].mxu0
        %v431 = vadd.f32 %v303, %v430
        %v432 = vpop.f32.mrb[0].mxu0
        %433 = vdwg.mxu0
        %v434 = vmax.f32 %v431, 0.0
        %v435 = vld [vmem:[%s3] sm:$0x3]
        %v436 = vld [vmem:[%s4] sm:$0x1]
        %v438 = vlaneseq
        %v439 = vshrl.u32 %v438, 7
        %v440 = vsub.s32 0, %v439
        %v441 = vrot.slane %v436, %v440
        %vm443 = vcmask 15360
        %v445 = vsel %vm443, %v434, 0
        %vm447 = vcmask 1041408
        %v449 = vsel %vm447, %v435, 0
        %451 = vmatprep.subr.mxu0 0.0
        %452 = vmatpush1.msra.mxu0 %v449
        %453 = vmatprep.subr.mxu0 0.0
        %454 = vmatpush1.msra.mxu0 0.0
        %455 = vmatprep.subr.mxu0 0.0
        %456 = vmatpush1.msra.mxu0 0.0
        %457 = vmatprep.subr.mxu0 0.0
        %458 = vmatpush1.msra.mxu0 0.0
        %459 = vmatprep.subr.mxu0 0.0
        %460 = vmatpush1.msra.mxu0 0.0
        %461 = vmatprep.subr.mxu0 0.0
        %462 = vmatpush1.msra.mxu0 0.0
        %463 = vmatprep.subr.mxu0 0.0
        %464 = vmatpush1.msra.mxu0 0.0
        %465 = vmatprep.subr.mxu0 0.0
        %466 = vmatpush1.msra.mxu0 0.0
        %467 = vmatprep.subr.mxu0 0.0
        %468 = vmatpush1.msra.mxu0 0.0
        %469 = vmatprep.subr.mxu0 0.0
        %470 = vmatpush1.msra.mxu0 0.0
        %471 = vmatprep.subr.mxu0 0.0
        %472 = vmatpush1.msra.mxu0 0.0
        %473 = vmatprep.subr.mxu0 0.0
        %474 = vmatpush1.msra.mxu0 0.0
        %475 = vmatprep.subr.mxu0 0.0
        %476 = vmatpush1.msra.mxu0 0.0
        %477 = vmatprep.subr.mxu0 0.0
        %478 = vmatpush1.msra.mxu0 0.0
        %479 = vmatprep.subr.mxu0 0.0
        %480 = vmatpush1.msra.mxu0 0.0
        %481 = vmatprep.subr.mxu0 0.0
        %482 = vmatpush1.msra.mxu0 0.0
        %483 = vmatprep.subr.mxu0 0.0
        %484 = vmatpush1.msra.mxu0 0.0
        %485 = vmatprep.subr.mxu0 0.0
        %486 = vmatpush1.msra.mxu0 0.0
        %487 = vmatprep.subr.mxu0 0.0
        %488 = vmatpush1.msra.mxu0 0.0
        %489 = vmatprep.subr.mxu0 0.0
        %490 = vmatpush1.msra.mxu0 0.0
        %491 = vmatprep.subr.mxu0 0.0
        %492 = vmatpush1.msra.mxu0 0.0
        %493 = vmatprep.subr.mxu0 0.0
        %494 = vmatpush1.msra.mxu0 0.0
        %495 = vmatprep.subr.mxu0 0.0
        %496 = vmatpush1.msra.mxu0 0.0
        %497 = vmatprep.subr.mxu0 0.0
        %498 = vmatpush1.msra.mxu0 0.0
        %499 = vmatprep.subr.mxu0 0.0
        %500 = vmatpush1.msra.mxu0 0.0
        %501 = vmatprep.subr.mxu0 0.0
        %502 = vmatpush1.msra.mxu0 0.0
        %503 = vmatprep.subr.mxu0 0.0
        %504 = vmatpush1.msra.mxu0 0.0
        %505 = vmatprep.subr.mxu0 0.0
        %506 = vmatpush1.msra.mxu0 0.0
        %507 = vmatprep.subr.mxu0 0.0
        %508 = vmatpush1.msra.mxu0 0.0
        %509 = vmatprep.subr.mxu0 0.0
        %510 = vmatpush1.msra.mxu0 0.0
        %511 = vmatprep.subr.mxu0 0.0
        %512 = vmatpush1.msra.mxu0 0.0
        %513 = vmatprep.subr.mxu0 0.0
        %514 = vmatpush1.msra.mxu0 0.0
        %515 = vmatprep.mubr.f32.mxu0 0.0
        %516 = vmatmul.mubr.f32.gmra.mrb[0].mxu0 %v445
        %v517 = vpop.f32.mrb[0].mxu0
        %v518 = vadd.f32 %v441, %v517
        %v519 = vpop.f32.mrb[0].mxu0
        %520 = vdwg.mxu0
        %v521 = vsub.f32 0.0, %v518
        %v522 = vmul.f32 %v521, 1.442695
        %v523 = vpow.pop %v522
        %v524 = vadd.f32 %v523, 1.0
        %v525 = vrcp.pop %v524
        %v526 = vmul.f32 1.0, %v525
        %v527 = vlaneseq
        %v528 = vshrl.u32 %v527, 7
        %v529 = vsub.s32 0, %v528
        %v530 = vrot.slane %v526, %v529
        %532 = vbcast.lane.b32.xlu0 %v530, 256
        %v533 = vpop.permute.xlu0 %532
        %s535 = sor.u32 256, 8
        %536 = vbcast.lane.b32.xlu0 %v530, %s535
        %v537 = vpop.permute.xlu0 %536
        %s539 = sor.u32 256, 16
        %540 = vbcast.lane.b32.xlu0 %v530, %s539
        %v541 = vpop.permute.xlu0 %540
        %s543 = sor.u32 256, 24
        %544 = vbcast.lane.b32.xlu0 %v530, %s543
        %v545 = vpop.permute.xlu0 %544
        %v546 = vlaneseq
        %v547 = vshrl.u32 %v546, 7
        %v548 = vsub.s32 1, %v547
        %v549 = vrot.slane %v526, %v548
        %551 = vbcast.lane.b32.xlu0 %v549, 256
        %v552 = vpop.permute.xlu0 %551
        %s554 = sor.u32 256, 8
        %555 = vbcast.lane.b32.xlu0 %v549, %s554
        %v556 = vpop.permute.xlu0 %555
        %s558 = sor.u32 256, 16
        %559 = vbcast.lane.b32.xlu0 %v549, %s558
        %v560 = vpop.permute.xlu0 %559
        %s562 = sor.u32 256, 24
        %563 = vbcast.lane.b32.xlu0 %v549, %s562
        %v564 = vpop.permute.xlu0 %563
        %v565 = vmul.f32 %v246, %v533
        %v566 = vmul.f32 %v247, %v533
        %v567 = vmul.f32 %v248, %v537
        %v568 = vmul.f32 %v249, %v537
        %v569 = vmul.f32 %v250, %v541
        %v570 = vmul.f32 %v251, %v541
        %v571 = vmul.f32 %v252, %v545
        %v572 = vmul.f32 %v253, %v545
        %v573 = vmul.f32 %v254, %v552
        %v574 = vmul.f32 %v255, %v552
        %v575 = vmul.f32 %v256, %v556
        %v576 = vmul.f32 %v257, %v556
        %v577 = vmul.f32 %v258, %v560
        %v578 = vmul.f32 %v259, %v560
        %v579 = vmul.f32 %v260, %v564
        %v580 = vmul.f32 %v261, %v564
        %581 = vst [vmem:[%s243] sm:$0xff] %v565
        %582 = vst [vmem:[%s243 + $0x8] sm:$0xff] %v566
        %583 = vst [vmem:[%s243 + $0x10] sm:$0xff] %v567
        %584 = vst [vmem:[%s243 + $0x18] sm:$0xff] %v568
        %585 = vst [vmem:[%s243 + $0x20] sm:$0xff] %v569
        %586 = vst [vmem:[%s243 + $0x28] sm:$0xff] %v570
        %587 = vst [vmem:[%s243 + $0x30] sm:$0xff] %v571
        %588 = vst [vmem:[%s243 + $0x38] sm:$0xff] %v572
        %589 = vst [vmem:[%s243 + $0x40] sm:$0xff] %v573
        %590 = vst [vmem:[%s243 + $0x48] sm:$0xff] %v574
        %591 = vst [vmem:[%s243 + $0x50] sm:$0xff] %v575
        %592 = vst [vmem:[%s243 + $0x58] sm:$0xff] %v576
        %593 = vst [vmem:[%s243 + $0x60] sm:$0xff] %v577
        %594 = vst [vmem:[%s243 + $0x68] sm:$0xff] %v578
        %595 = vst [vmem:[%s243 + $0x70] sm:$0xff] %v579
        %596 = vst [vmem:[%s243 + $0x78] sm:$0xff] %v580
        %s597 = sand.u32 %s140, 1
        %s598 = scalar_lea.sflag [#allocation4], %s597
        %s599 = sand.u32 %s140, 1
        %s600 = smul.addr %s599, 128
        %s601 = scalar_lea.vmem [#allocation5], %s600
        // Predicated region
        $region45: #{tpu_custom_call.1} parent=39 // pred_check
          %p602 = pneg %p150
        $region46: #{tpu_custom_call.1} parent=39 // pred_check_branch
          %604 = sbr.rel (%p602) target = $region48
        $region47: #{tpu_custom_call.1} parent=39 // pred_region
          %s605 = smul.u32 2, %s22
          %s607 = ssub.s32 2048, 2048
          %608 = vsyncadd %s598, %s607
          %s609 = smul.addr %s605, 8
          %s610 = smul.addr %s609, 128
          %s611 = scalar_lea.hbm %s5, %s610
          %s612 = sshll.u32 %s601, 4
          %s613 = int_to_ptr.vmem [resolvable:$true] %s612
          %618 = dma.vmem_to_hbm [thread:$0]  %s613, 2048, %s611, %s598, 256, 256, 16
        $region48: #{tpu_custom_call.1} parent=39 // pred_fallthru
          _
      $region40: #{tpu_custom_call.1} parent=5 // pred_fallthru
        _
      %p619 = scmp.le.s32.totalorder 2, %s17
      // Predicated region
      $region49: #{tpu_custom_call.1} parent=5 // pred_check
        %p620 = pneg %p619
      $region50: #{tpu_custom_call.1} parent=5 // pred_check_branch
        %622 = sbr.rel (%p620) target = $region52
      $region51: #{tpu_custom_call.1} parent=5 // pred_region
        %s623 = ssub.s32 %s17, 2
        // Predicated region
        $region53: #{tpu_custom_call.1} parent=51 // pred_check
          %p624 = pneg %p156
        $region54: #{tpu_custom_call.1} parent=51 // pred_check_branch
          %626 = sbr.rel (%p624) target = $region56
        $region55: #{tpu_custom_call.1} parent=51 // pred_region
          %s627 = sand.u32 %s141, 1
          %s628 = scalar_lea.sflag [#allocation4], %s627
          %s629 = sand.u32 %s141, 1
          %s630 = smul.addr %s629, 128
          %s631 = scalar_lea.vmem [#allocation5], %s630
          %632 = dma.done %s628, 2048
        $region56: #{tpu_custom_call.1} parent=51 // pred_fallthru
          _
      $region52: #{tpu_custom_call.1} parent=5 // pred_fallthru
        _
    $region6: #{tpu_custom_call.1} parent=1 // loop_footer
      %s21 = sadd.s32 1, %s17
    $region7: #{tpu_custom_call.1} parent=1 // loop_footer_branch
      %16 = sbr.rel target = $region3
    $region8: #{tpu_custom_call.1} parent=1 // loop_exit
      _
    %633 = vsyncpa [#allocation3], 1
    %s634 = scalar_lea.sflag [#allocation3], 1
    %635 = vsyncpa %s634, 1
    %636 = vsyncpa [#allocation4], 1
    %s637 = scalar_lea.sflag [#allocation4], 1
    %638 = vsyncpa %s637, 1

</llo_original>
